<compile_context>
chip_gen: v7x
topology: tpu7x:2x2x1
jax: 0.10.0
libtpu: 0.0.40
codegen_flags: <defaults>
</compile_context>

<pallas_src>
import math

import jax
import jax.numpy as jnp
from jax import lax
from jax.experimental import pallas as pl
from jax.experimental.pallas import tpu as pltpu


# ----------------------------------------------------------------------------
# VMEM budgeting: size the scoped limit from the resident set of each call,
# with double-buffering + compiler-scratch headroom, clamped so it stays below
# v7x's 64 MiB physical VMEM (min 20 MiB floor).
# ----------------------------------------------------------------------------
def _vmem_limit(resident_bytes):
    est = int(resident_bytes) * 2 + (8 << 20)
    return max(min(est, 56 << 20), 20 << 20)


# ----------------------------------------------------------------------------
# math helpers (traced inside kernels; _layernorm is also valid plain-JAX)
# ----------------------------------------------------------------------------
def _layernorm(x, g, b, eps=1e-5):
    # torch.nn.LayerNorm semantics: biased variance over last dim, eps=1e-5
    mu = jnp.mean(x, axis=-1, keepdims=True)
    xc = x - mu
    var = jnp.mean(xc * xc, axis=-1, keepdims=True)
    inv = lax.rsqrt(var + eps)
    return xc * inv * g + b


def _erf(x):
    # Abramowitz & Stegun 7.1.26; exp + approx reciprocal go to the EUP slot.
    a1, a2, a3, a4, a5 = 0.254829592, -0.284496736, 1.421413741, -1.453152027, 1.061405429
    p = 0.3275911
    sgn = jnp.where(x >= 0.0, 1.0, -1.0)
    ax = jnp.abs(x)
    t = pl.reciprocal(1.0 + p * ax, approx=True)
    poly = ((((a5 * t + a4) * t + a3) * t + a2) * t + a1) * t
    return sgn * (1.0 - poly * jnp.exp(-ax * ax))


def _gelu(x):
    # erf-based GELU, matching torch nn.GELU() default (approximate='none')
    return 0.5 * x * (1.0 + _erf(x * (1.0 / math.sqrt(2.0))))


# ----------------------------------------------------------------------------
# tile choosers
# ----------------------------------------------------------------------------
def _choose_batch_tile(B, N, C, hidden):
    """Batch elements per grid step.  Bt must divide B and give a row block
    (Bt*N) that is 8-aligned or spans the whole batch; bounded by a per-step
    activation budget so the VMEM limit stays v7x-safe."""
    budget = 20 << 20
    cands = [bt for bt in range(min(B, 8), 0, -1)
             if B % bt == 0 and (bt == B or (bt * N) % 8 == 0)]
    if not cands:
        cands = [B]
    for bt in cands:
        rows = bt * N
        attn_bytes = rows * (4 * C + 4 * 3 * C + 2 * C) + N * N * 4
        mlp_bytes = rows * (4 * C + 4 * C + 2 * C + 4 * hidden)
        if max(attn_bytes, mlp_bytes) <= budget:
            return bt
    return cands[-1]


def _choose_hidden_tile(hidden):
    if hidden <= 2048:
        return hidden
    for t in range(2048, 127, -128):
        if hidden % t == 0:
            return t
    return hidden


def _choose_patch_tile(P):
    if P <= 512:
        return P
    for t in range(512, 7, -8):
        if P % t == 0:
            return t
    return P


# ----------------------------------------------------------------------------
# Patch-embedding kernel: (tp, Cin*p*p) @ (Cin*p*p, E) + (pos_embed + conv bias)
# ----------------------------------------------------------------------------
def _patch_embed_kernel(p_ref, w_ref, posb_ref, o_ref):
    p = p_ref[0].astype(jnp.bfloat16)
    o_ref[0] = (jnp.dot(p, w_ref[...], preferred_element_type=jnp.float32)
                + posb_ref[...])


def patch_embed(patches, w, pos_bias):
    B, P, K = patches.shape
    E = w.shape[1]
    tp = _choose_patch_tile(P)                       # tp divides P exactly
    est = tp * K * 4 + K * E * 2 + tp * E * 4 * 2
    return pl.pallas_call(
        _patch_embed_kernel,
        out_shape=jax.ShapeDtypeStruct((B, P, E), jnp.float32),
        grid=(B, P // tp),
        in_specs=[
            pl.BlockSpec((1, tp, K), lambda bi, ti: (bi, ti, 0)),
            pl.BlockSpec((K, E), lambda bi, ti: (0, 0)),
            pl.BlockSpec((tp, E), lambda bi, ti: (ti, 0)),
        ],
        out_specs=pl.BlockSpec((1, tp, E), lambda bi, ti: (bi, ti, 0)),
        compiler_params=pltpu.CompilerParams(
            dimension_semantics=("parallel", "parallel"),
            vmem_limit_bytes=_vmem_limit(est)),
    )(patches, w, pos_bias)


# ----------------------------------------------------------------------------
# Attention kernel: one grid step handles Bt batch elements (Bt*N rows)
#   out = x + proj(attn(LN1(x)))
# ----------------------------------------------------------------------------
def _make_attn_kernel(bt, n_tok, num_heads, head_dim):
    C = num_heads * head_dim
    scale = head_dim ** (-0.5)

    def kernel(x_ref, g_ref, b_ref, wqkv_ref, wproj_ref, bproj_ref, o_ref, attn_sc):
        x = x_ref[...]                                               # (bt*N, C) f32
        h = _layernorm(x, g_ref[0], b_ref[0]).astype(jnp.bfloat16)
        # single full-width QKV projection: (bt*N, C) @ (C, 3C), f32 accumulation
        qkv = jnp.dot(h, wqkv_ref[...], preferred_element_type=jnp.float32)

        for b in range(bt):
            r0 = b * n_tok
            for hh in range(num_heads):
                lo = hh * head_dim
                # scale folded into q (cheaper on (N, hd) than on the (N, N) scores)
                q = (qkv[r0:r0 + n_tok, lo:lo + head_dim] * scale).astype(jnp.bfloat16)
                k = qkv[r0:r0 + n_tok, C + lo:C + lo + head_dim].astype(jnp.bfloat16)
                v = qkv[r0:r0 + n_tok, 2 * C + lo:2 * C + lo + head_dim].astype(jnp.bfloat16)

                # q @ k^T expressed as dot_general contracting on head_dim:
                # MXU transposed-rhs path, no explicit vxpose of k.
                s = lax.dot_general(q, k, (((1,), (1,)), ((), ())),
                                    preferred_element_type=jnp.float32)
                s = s - jnp.max(s, axis=-1, keepdims=True)
                # f32 exp keeps the lowering portable across v5e/v6e/v7x; the
                # probabilities are cast to bf16 only for the PV matmul.
                e = jnp.exp(s)
                denom = jnp.sum(e, axis=-1, keepdims=True)
                o_h = jnp.dot(e.astype(jnp.bfloat16), v,
                              preferred_element_type=jnp.float32)
                # deferred softmax normalization on the (N, hd) result (EUP recip)
                o_h = o_h * pl.reciprocal(denom, approx=True)
                # write the head output straight into the (M, C) bf16 scratch at
                # its static offset — no per-head concatenation / relayout copies
                attn_sc[r0:r0 + n_tok, lo:lo + head_dim] = o_h.astype(jnp.bfloat16)

        y = jnp.dot(attn_sc[...], wproj_ref[...],
                    preferred_element_type=jnp.float32) + bproj_ref[0]
        o_ref[...] = x + y                                           # residual

    return kernel


def attention_block(x2d, blk, *, batch, n_tok, num_heads, bt):
    M, C = x2d.shape
    tm = bt * n_tok
    head_dim = C // num_heads
    est = (tm * C * 4 * 2                       # in/out blocks (f32)
           + (C * 3 * C + C * C) * 2            # bf16 weights
           + tm * C * 2                         # attention scratch
           + tm * 3 * C * 4                     # qkv intermediate
           + n_tok * n_tok * 4)                 # per-head score matrix
    return pl.pallas_call(
        _make_attn_kernel(bt, n_tok, num_heads, head_dim),
        out_shape=jax.ShapeDtypeStruct((M, C), jnp.float32),
        grid=(batch // bt,),
        in_specs=[
            pl.BlockSpec((tm, C), lambda i: (i, 0)),
            pl.BlockSpec((1, C), lambda i: (0, 0)),
            pl.BlockSpec((1, C), lambda i: (0, 0)),
            pl.BlockSpec((C, 3 * C), lambda i: (0, 0)),
            pl.BlockSpec((C, C), lambda i: (0, 0)),
            pl.BlockSpec((1, C), lambda i: (0, 0)),
        ],
        out_specs=pl.BlockSpec((tm, C), lambda i: (i, 0)),
        scratch_shapes=[pltpu.VMEM((tm, C), jnp.bfloat16)],
        compiler_params=pltpu.CompilerParams(
            dimension_semantics=("parallel",),
            vmem_limit_bytes=_vmem_limit(est)),
    )(x2d, blk["ln1_g"], blk["ln1_b"], blk["w_qkv"], blk["w_proj"], blk["b_proj"])


# ----------------------------------------------------------------------------
# MLP kernel: out = x + fc2(GELU(fc1(LN2(x)))), hidden dim tiled on a trailing
# "arbitrary" grid axis with an f32 accumulator scratch (keeps ViT-L/H weight
# tiles inside v7x VMEM); LN(x) is cached in a bf16 scratch at k==0.
# ----------------------------------------------------------------------------
def _mlp_kernel(x_ref, g_ref, b_ref, w1_ref, b1_ref, w2_ref, b2_ref, o_ref,
                h_sc, acc_sc):
    k = pl.program_id(1)

    @pl.when(k == 0)
    def _():
        h_sc[...] = _layernorm(x_ref[...], g_ref[0], b_ref[0]).astype(jnp.bfloat16)
        acc_sc[...] = jnp.zeros_like(acc_sc)

    m = jnp.dot(h_sc[...], w1_ref[...], preferred_element_type=jnp.float32) + b1_ref[0]
    m = _gelu(m).astype(jnp.bfloat16)
    acc_sc[...] += jnp.dot(m, w2_ref[...], preferred_element_type=jnp.float32)

    @pl.when(k == pl.num_programs(1) - 1)
    def _():
        o_ref[...] = x_ref[...] + acc_sc[...] + b2_ref[0]            # residual


def mlp_block(x2d, blk, *, batch, n_tok, bt):
    M, C = x2d.shape
    hidden = blk["w_fc1"].shape[1]
    tm = bt * n_tok
    th = _choose_hidden_tile(hidden)
    est = (tm * C * 4 * 2                       # in/out blocks
           + (C * th + th * C) * 2 + th * 2     # bf16 weight tiles + bias
           + tm * C * 2 + tm * C * 4            # h scratch + acc scratch
           + tm * th * 4)                       # fc1 output tile
    return pl.pallas_call(
        _mlp_kernel,
        out_shape=jax.ShapeDtypeStruct((M, C), jnp.float32),
        grid=(batch // bt, hidden // th),
        in_specs=[
            pl.BlockSpec((tm, C), lambda i, k: (i, 0)),
            pl.BlockSpec((1, C), lambda i, k: (0, 0)),
            pl.BlockSpec((1, C), lambda i, k: (0, 0)),
            pl.BlockSpec((C, th), lambda i, k: (0, k)),
            pl.BlockSpec((1, th), lambda i, k: (0, k)),
            pl.BlockSpec((th, C), lambda i, k: (k, 0)),
            pl.BlockSpec((1, C), lambda i, k: (0, 0)),
        ],
        out_specs=pl.BlockSpec((tm, C), lambda i, k: (i, 0)),
        scratch_shapes=[pltpu.VMEM((tm, C), jnp.bfloat16),
                        pltpu.VMEM((tm, C), jnp.float32)],
        compiler_params=pltpu.CompilerParams(
            dimension_semantics=("parallel", "arbitrary"),
            vmem_limit_bytes=_vmem_limit(est)),
    )(x2d, blk["ln2_g"], blk["ln2_b"], blk["w_fc1"], blk["b_fc1"],
      blk["w_fc2"], blk["b_fc2"])


# ----------------------------------------------------------------------------
# Parameter init (deterministic, trunc-normal std=0.02 like the PyTorch module).
# Matmul weights stored bf16 (MXU bf16 rate, half the weight DMA); LN params,
# biases, cls token and pos_embed stay f32.
# ----------------------------------------------------------------------------
def _trunc_normal(key, shape, std=0.02, dtype=jnp.float32):
    v = std * jax.random.truncated_normal(key, -2.0, 2.0, shape, jnp.float32)
    return v.astype(dtype)


def init_params(key, *, img_size, patch_size, in_chans, embed_dim, depth,
                num_heads, mlp_ratio):
    num_patches = (img_size // patch_size) ** 2
    hidden = int(embed_dim * mlp_ratio)
    keys = jax.random.split(key, 4 + 4 * depth)
    ki = iter(keys)

    params = {
        # conv weight (E, Cin, p, p) stored flattened+transposed -> (Cin*p*p, E)
        "patch_w": _trunc_normal(next(ki), (in_chans * patch_size * patch_size, embed_dim),
                                 dtype=jnp.bfloat16),
        "patch_b": jnp.zeros((1, embed_dim), jnp.float32),
        "cls_token": _trunc_normal(next(ki), (1, 1, embed_dim)),
        "pos_embed": _trunc_normal(next(ki), (1, num_patches + 1, embed_dim)),
        "norm_g": jnp.ones((1, embed_dim), jnp.float32),
        "norm_b": jnp.zeros((1, embed_dim), jnp.float32),
        "blocks": [],
    }
    for _ in range(depth):
        params["blocks"].append({
            "ln1_g": jnp.ones((1, embed_dim), jnp.float32),
            "ln1_b": jnp.zeros((1, embed_dim), jnp.float32),
            # torch weights are (out, in); stored transposed -> (in, out). qkv_bias=False.
            "w_qkv": _trunc_normal(next(ki), (embed_dim, 3 * embed_dim), dtype=jnp.bfloat16),
            "w_proj": _trunc_normal(next(ki), (embed_dim, embed_dim), dtype=jnp.bfloat16),
            "b_proj": jnp.zeros((1, embed_dim), jnp.float32),
            "ln2_g": jnp.ones((1, embed_dim), jnp.float32),
            "ln2_b": jnp.zeros((1, embed_dim), jnp.float32),
            "w_fc1": _trunc_normal(next(ki), (embed_dim, hidden), dtype=jnp.bfloat16),
            "b_fc1": jnp.zeros((1, hidden), jnp.float32),
            "w_fc2": _trunc_normal(next(ki), (hidden, embed_dim), dtype=jnp.bfloat16),
            "b_fc2": jnp.zeros((1, embed_dim), jnp.float32),
        })
    return params


# ----------------------------------------------------------------------------
# Full forward pass (returns norm(x)[:, 0], like the PyTorch module)
# ----------------------------------------------------------------------------
def vit_forward(params, x, *, patch_size, num_heads):
    B, Cin, H, W = x.shape
    p = patch_size
    E = params["patch_w"].shape[1]
    hidden = params["blocks"][0]["w_fc1"].shape[1]

    # patchify glue: NCHW -> (B, P, Cin*p*p), matching Conv2d(k=p, s=p)+flatten+T
    patches = (x.reshape(B, Cin, H // p, p, W // p, p)
                .transpose(0, 2, 4, 1, 3, 5)
                .reshape(B, (H // p) * (W // p), Cin * p * p))
    P = patches.shape[1]

    # fold the conv bias into the patch positional embedding (one fewer DMA stream)
    pos_bias = params["pos_embed"][0, 1:, :] + params["patch_b"]     # (P, E)
    tok = patch_embed(patches, params["patch_w"], pos_bias)          # (B, P, E)

    cls = jnp.broadcast_to(params["cls_token"] + params["pos_embed"][:, :1, :], (B, 1, E))
    xtok = jnp.concatenate([cls, tok], axis=1)                       # (B, N, E)
    N = P + 1

    # keep the residual stream flattened to (B*N, E): every dense matmul in the
    # kernels then runs on a large, layout-clean (Bt*N, C) block
    x2d = xtok.reshape(B * N, E)
    bt = _choose_batch_tile(B, N, E, hidden)
    for blk in params["blocks"]:
        x2d = attention_block(x2d, blk, batch=B, n_tok=N, num_heads=num_heads, bt=bt)
        x2d = mlp_block(x2d, blk, batch=B, n_tok=N, bt=bt)

    # final LayerNorm only on the cls rows (the only rows the module returns);
    # a (B, C) sliver of VPU work is cheaper as plain XLA than a pallas_call.
    cls_rows = x2d.reshape(B, N, E)[:, 0, :]
    return _layernorm(cls_rows, params["norm_g"], params["norm_b"])


if __name__ == "__main__":
    # small, TPU-friendly demo shapes: lane-dense embed dim (128), 17 tokens
    cfg = dict(img_size=16, patch_size=4, in_chans=3, embed_dim=128,
               depth=2, num_heads=4, mlp_ratio=4.0)

    key = jax.random.PRNGKey(0)
    kp, kx = jax.random.split(key)
    params = init_params(kp, **cfg)

    x = jax.random.normal(kx, (2, cfg["in_chans"], cfg["img_size"], cfg["img_size"]),
                          dtype=jnp.float32)

    out = vit_forward(params, x, patch_size=cfg["patch_size"], num_heads=cfg["num_heads"])
    out = jax.block_until_ready(out)
    assert out.shape == (2, cfg["embed_dim"]) and out.dtype == jnp.float32
    assert bool(jnp.all(jnp.isfinite(out)))

    print("KERNEL_OK")
</pallas_src>

<mosaic_0001>
module attributes {stable_mosaic.version = 11 : i64} {
  func.func @_patch_embed_kernel(%arg0: i32, %arg1: i32, %arg2: memref<1x16x48xf32, #tpu.memory_space<vmem>>, %arg3: memref<48x128xbf16, #tpu.memory_space<vmem>>, %arg4: memref<16x128xf32, #tpu.memory_space<vmem>>, %arg5: memref<1x16x128xf32, #tpu.memory_space<vmem>>) attributes {dimension_semantics = [#tpu.dimension_semantics<parallel>, #tpu.dimension_semantics<parallel>], iteration_bounds = array<i64: 2, 1>, scalar_prefetch = 0 : i64, scratch_operands = 0 : i64, tpu.core_type = #tpu.core_type<tc>, window_params = [{transform_indices = @transform_0, window_bounds = array<i64: 1, 16, 48>}, {pipeline_mode = #tpu.pipeline_mode<synchronous>, transform_indices = @transform_1, window_bounds = array<i64: 48, 128>}, {transform_indices = @transform_2, window_bounds = array<i64: 16, 128>}, {transform_indices = @transform_3, window_bounds = array<i64: 1, 16, 128>}]} {
    %c0 = arith.constant 0 : index
    %c0_0 = arith.constant 0 : index
    %c0_1 = arith.constant 0 : index
    %0 = vector.load %arg2[%c0, %c0_0, %c0_1] : memref<1x16x48xf32, #tpu.memory_space<vmem>>, vector<1x16x48xf32>
    %1 = vector.shape_cast %0 : vector<1x16x48xf32> to vector<16x48xf32>
    %2 = arith.truncf %1 : vector<16x48xf32> to vector<16x48xbf16>
    %c0_2 = arith.constant 0 : index
    %c0_3 = arith.constant 0 : index
    %3 = vector.load %arg3[%c0_2, %c0_3] : memref<48x128xbf16, #tpu.memory_space<vmem>>, vector<48x128xbf16>
    %cst = arith.constant dense<0.000000e+00> : vector<16x128xf32>
    %4 = tpu.matmul %2, %3, %cst {dimension_numbers = #tpu.dot_dimension_numbers<[1], [0], [0], [1], [0, 0, 1, 1], [], []>} : vector<16x48xbf16>, vector<48x128xbf16>, vector<16x128xf32> -> vector<16x128xf32>
    %c0_4 = arith.constant 0 : index
    %c0_5 = arith.constant 0 : index
    %5 = vector.load %arg4[%c0_4, %c0_5] : memref<16x128xf32, #tpu.memory_space<vmem>>, vector<16x128xf32>
    %6 = arith.addf %4, %5 : vector<16x128xf32>
    %c0_6 = arith.constant 0 : index
    %c0_7 = arith.constant 0 : index
    %c0_8 = arith.constant 0 : index
    %7 = vector.load %arg5[%c0_6, %c0_7, %c0_8] : memref<1x16x128xf32, #tpu.memory_space<vmem>>, vector<1x16x128xf32>
    %8 = vector.shape_cast %7 : vector<1x16x128xf32> to vector<16x128xf32>
    %9 = vector.shape_cast %6 : vector<16x128xf32> to vector<1x16x128xf32>
    tpu.vector_store %arg5[%c0_6, %c0_7, %c0_8], %9 {strides = array<i32>} : memref<1x16x128xf32, #tpu.memory_space<vmem>>, vector<1x16x128xf32>,
    return
  }
  func.func @transform_0(%arg0: i32, %arg1: i32) -> (i32, i32, i32) {
    %c0_i32 = arith.constant 0 : i32
    %c0_i32_0 = arith.constant 0 : i32
    return %arg0, %arg1, %c0_i32 : i32, i32, i32
  }
  func.func @transform_1(%arg0: i32, %arg1: i32) -> (i32, i32) {
    %c0_i32 = arith.constant 0 : i32
    %c0_i32_0 = arith.constant 0 : i32
    %c0_i32_1 = arith.constant 0 : i32
    return %c0_i32, %c0_i32_0 : i32, i32
  }
  func.func @transform_2(%arg0: i32, %arg1: i32) -> (i32, i32) {
    %c0_i32 = arith.constant 0 : i32
    %c0_i32_0 = arith.constant 0 : i32
    return %arg1, %c0_i32 : i32, i32
  }
  func.func @transform_3(%arg0: i32, %arg1: i32) -> (i32, i32, i32) {
    %c0_i32 = arith.constant 0 : i32
    %c0_i32_0 = arith.constant 0 : i32
    return %arg0, %arg1, %c0_i32 : i32, i32, i32
  }
}

</mosaic_0001>

<llo_original>
// kernel: tpu_custom_call.1
$region0: #{tpu_custom_call.1}
  #allocation0 [shape = 'u32[]', space=smem, size = 0x4, offset = 0x4, fixed_abs, tag = 'smem constant byte address 0x4 - core index']
  #allocation1 [shape = 'u32[144,128]{1,0:T(1,128)}', space=vmem, size = 0x12000, scoped, tag = 'internal scratch']
  %s0 = inlined_call_operand.hbm [shape: f32[2,16,48], index: 0, kind: input, shape index: {}]
  %s1 = inlined_call_operand.hbm [shape: bf16[48,128], index: 1, kind: input, shape index: {}]
  %s2 = inlined_call_operand.hbm [shape: f32[16,128], index: 2, kind: input, shape index: {}]
  %s3 = inlined_call_operand.hbm [shape: f32[2,16,128], index: 3, kind: output, shape index: {}]
  %s4 = sld [smem:[#allocation0]]
  $region57: #{tpu_custom_call.1} parent=0
    _
  %s6 = ssub.s32 1, %s4
  %s7 = scalar_select 0, %s6, %s4
  $region1: #{tpu_custom_call.1} parent=0
    #allocation2 [shape = 'u8[16384]{0}', space=vmem, size = 0x4000, scoped, tag = 'input window, operand 0']
    #allocation3 [shape = 's32[2]{0}', space=sflag, size = 0x8, scoped, tag = 'scoped memory for tpu_custom_call.1']
    #allocation4 [shape = 's32[2]{0}', space=sflag, size = 0x8, scoped, tag = 'scoped memory for tpu_custom_call.1']
    #allocation5 [shape = 'u8[12288]{0}', space=vmem, size = 0x3000, scoped, tag = 'input window, operand 1, single buffered']
    #allocation6 [shape = 's32[1]{0}', space=sflag, size = 0x4, scoped, tag = 'scoped memory for tpu_custom_call.1']
    #allocation7 [shape = 'u8[8192]{0}', space=vmem, size = 0x2000, scoped, tag = 'input window, operand 2, single buffered']
    #allocation8 [shape = 'u8[16384]{0}', space=vmem, size = 0x4000, scoped, tag = 'output window, operand 0']
    %8 = vsyncpa [#allocation3], 0
    %s9 = scalar_lea.sflag [#allocation3], 1
    %10 = vsyncpa %s9, 0
    %11 = vsyncpa [#allocation6], 0
    %12 = vsyncpa [#allocation4], 0
    %s13 = scalar_lea.sflag [#allocation4], 1
    %14 = vsyncpa %s13, 0
    loop: start=0, step=1, limit=4
    $region2: #{tpu_custom_call.1} parent=1 // loop_pre_header
      _
    $region3: #{tpu_custom_call.1} parent=1 // loop_header
      %s16 = sphi 0, %s20
      %p17 = scmp.ge.s32.totalorder %s16, 4
      %s23 = sphi 0, %s35
      %s24 = sphi 0, %s31
      %s25 = sphi 0, %s23
      %s26 = sphi 0, %s24
      %s27 = sphi 0, %s25
      %s28 = sphi 0, %s26
      %s40 = sphi 0, %s42
      %s43 = sphi 0, %s40
      %s44 = sphi 0, %s43
      %s60 = sphi 0, %s44
      %s64 = sphi 0, %s64
      %s66 = sphi 0, %s64
      %s67 = sphi 0, %s66
      %s81 = sphi 0, %s67
      %s87 = sphi 0, %s89
      %s90 = sphi 0, %s87
      %s91 = sphi 0, %s90
      %s107 = sphi 0, %s91
      %s115 = sphi 0, %s117
      %s118 = sphi 0, %s115
      %s119 = sphi 0, %s118
      %s135 = sphi 0, %s119
    $region4: #{tpu_custom_call.1} parent=1 // loop_header_branch
      %19 = sbr.rel (%p17) target = $region8
    $region5: #{tpu_custom_call.1} parent=1 // loop_body
      %s21 = ssub.s32 %s16, 1
      %s22 = ssub.s32 %s16, 2
      %s29 = sadd.s32 1, %s24
      %p30 = scmp.ge.s32.totalorder %s29, 1
      %s31 = scalar_select %p30, 0, %s29
      %s32 = sadd.s32 1, %s23
      %s33 = scalar_select %p30, %s32, %s23
      %p34 = scmp.ge.s32.totalorder %s33, 2
      %s35 = scalar_select %p34, 0, %s33
      %s36 = ssub.s32 %s23, %s35
      %s37 = ssub.s32 %s24, %s31
      %s38 = sor.u32 %s36, %s37
      %p39 = scmp.eq.s32.totalorder %s38, 0
      %s41 = sadd.s32 %s40, 1
      %s42 = scalar_select %p39, %s40, %s41
      %p45 = pneg %p39
      %p46 = scmp.eq.s32.totalorder %s16, 1
      %p47 = por %p45, %p46
      %p48 = scmp.ne.s32.totalorder %s40, %s43
      %p49 = scmp.eq.s32.totalorder %s16, 0
      %p50 = por %p48, %p49
      %p51 = scmp.ne.s32.totalorder %s40, %s43
      %p52 = scmp.eq.s32.totalorder %s21, 1
      %p53 = por %p51, %p52
      %p54 = scmp.ne.s32.totalorder %s43, %s44
      %p55 = scmp.eq.s32.totalorder %s21, 0
      %p56 = por %p54, %p55
      %p57 = scmp.ne.s32.totalorder %s43, %s44
      %p58 = scmp.eq.s32.totalorder %s22, 1
      %p59 = por %p57, %p58
      %p61 = scmp.ne.s32.totalorder %s44, %s60
      %p62 = scmp.eq.s32.totalorder %s22, 0
      %p63 = por %p61, %p62
      %s65 = sadd.s32 %s64, 1
      %p68 = scmp.eq.s32.totalorder %s16, 1
      %p69 = scmp.ne.s32.totalorder %s64, %s66
      %p70 = scmp.eq.s32.totalorder %s16, 0
      %p71 = por %p69, %p70
      %p72 = scmp.ne.s32.totalorder %s64, %s66
      %p73 = scmp.eq.s32.totalorder %s21, 1
      %p74 = por %p72, %p73
      %p75 = scmp.ne.s32.totalorder %s66, %s67
      %p76 = scmp.eq.s32.totalorder %s21, 0
      %p77 = por %p75, %p76
      %p78 = scmp.ne.s32.totalorder %s66, %s67
      %p79 = scmp.eq.s32.totalorder %s22, 1
      %p80 = por %p78, %p79
      %p82 = scmp.ne.s32.totalorder %s67, %s81
      %p83 = scmp.eq.s32.totalorder %s22, 0
      %p84 = por %p82, %p83
      %s85 = ssub.s32 %s24, %s31
      %p86 = scmp.eq.s32.totalorder %s85, 0
      %s88 = sadd.s32 %s87, 1
      %s89 = scalar_select %p86, %s87, %s88
      %p92 = pneg %p86
      %p93 = scmp.eq.s32.totalorder %s16, 1
      %p94 = por %p92, %p93
      %p95 = scmp.ne.s32.totalorder %s87, %s90
      %p96 = scmp.eq.s32.totalorder %s16, 0
      %p97 = por %p95, %p96
      %p98 = scmp.ne.s32.totalorder %s87, %s90
      %p99 = scmp.eq.s32.totalorder %s21, 1
      %p100 = por %p98, %p99
      %p101 = scmp.ne.s32.totalorder %s90, %s91
      %p102 = scmp.eq.s32.totalorder %s21, 0
      %p103 = por %p101, %p102
      %p104 = scmp.ne.s32.totalorder %s90, %s91
      %p105 = scmp.eq.s32.totalorder %s22, 1
      %p106 = por %p104, %p105
      %p108 = scmp.ne.s32.totalorder %s91, %s107
      %p109 = scmp.eq.s32.totalorder %s22, 0
      %p110 = por %p108, %p109
      %s111 = ssub.s32 %s23, %s35
      %s112 = ssub.s32 %s24, %s31
      %s113 = sor.u32 %s111, %s112
      %p114 = scmp.eq.s32.totalorder %s113, 0
      %s116 = sadd.s32 %s115, 1
      %s117 = scalar_select %p114, %s115, %s116
      %p120 = pneg %p114
      %p121 = scmp.eq.s32.totalorder %s16, 1
      %p122 = por %p120, %p121
      %p123 = scmp.ne.s32.totalorder %s115, %s118
      %p124 = scmp.eq.s32.totalorder %s16, 0
      %p125 = por %p123, %p124
      %p126 = scmp.ne.s32.totalorder %s115, %s118
      %p127 = scmp.eq.s32.totalorder %s21, 1
      %p128 = por %p126, %p127
      %p129 = scmp.ne.s32.totalorder %s118, %s119
      %p130 = scmp.eq.s32.totalorder %s21, 0
      %p131 = por %p129, %p130
      %p132 = scmp.ne.s32.totalorder %s118, %s119
      %p133 = scmp.eq.s32.totalorder %s22, 1
      %p134 = por %p132, %p133
      %p136 = scmp.ne.s32.totalorder %s119, %s135
      %p137 = scmp.eq.s32.totalorder %s22, 0
      %p138 = por %p136, %p137
      %p139 = scmp.le.s32.totalorder 1, %s16
      %p140 = scmp.lt.s32.totalorder %s16, 3
      %p141 = pnand %p139, %p140
      %p142 = pneg %p141
      // Predicated region
      $region9: #{tpu_custom_call.1} parent=5 // pred_check
        _
      $region10: #{tpu_custom_call.1} parent=5 // pred_check_branch
        %144 = sbr.rel (%p141) target = $region12
      $region11: #{tpu_custom_call.1} parent=5 // pred_region
        %s145 = ssub.s32 %s16, 1
        // Predicated region
        $region13: #{tpu_custom_call.1} parent=11 // pred_check
          %p146 = pneg %p77
        $region14: #{tpu_custom_call.1} parent=11 // pred_check_branch
          %148 = sbr.rel (%p146) target = $region16
        $region15: #{tpu_custom_call.1} parent=11 // pred_region
          %s150 = ssub.s32 384, 384
          %151 = vsyncadd [#allocation6], %s150
          %s152 = sshll.u32 [#allocation5], 4
          %s153 = int_to_ptr.vmem [resolvable:$true] %s152
          %158 = dma.hbm_to_vmem [thread:$0]  %s1, 384, %s153, [#allocation6], 64, 64, 4
        $region16: #{tpu_custom_call.1} parent=11 // pred_fallthru
          _
        // Predicated region
        $region17: #{tpu_custom_call.1} parent=11 // pred_check
          %p159 = pneg %p103
        $region18: #{tpu_custom_call.1} parent=11 // pred_check_branch
          %161 = sbr.rel (%p159) target = $region20
        $region19: #{tpu_custom_call.1} parent=11 // pred_region
          %s162 = smul.u32 2, %s26
          %s164 = ssub.s32 256, 256
          %165 = vsyncadd [#allocation6], %s164
          %s166 = smul.addr %s162, 128
          %s167 = scalar_lea.hbm %s2, %s166
          %s168 = sshll.u32 [#allocation7], 4
          %s169 = int_to_ptr.vmem [resolvable:$true] %s168
          %174 = dma.hbm_to_vmem [thread:$0]  %s167, 256, %s169, [#allocation6], 128, 128, 8
        $region20: #{tpu_custom_call.1} parent=11 // pred_fallthru
          _
      $region12: #{tpu_custom_call.1} parent=5 // pred_fallthru
        _
      %p175 = scmp.lt.s32.totalorder %s16, 2
      // Predicated region
      $region21: #{tpu_custom_call.1} parent=5 // pred_check
        %p176 = pneg %p175
      $region22: #{tpu_custom_call.1} parent=5 // pred_check_branch
        %178 = sbr.rel (%p176) target = $region24
      $region23: #{tpu_custom_call.1} parent=5 // pred_region
        // Predicated region
        $region25: #{tpu_custom_call.1} parent=23 // pred_check
          %p179 = pneg %p50
        $region26: #{tpu_custom_call.1} parent=23 // pred_check_branch
          %181 = sbr.rel (%p179) target = $region28
        $region27: #{tpu_custom_call.1} parent=23 // pred_region
          %s182 = sand.u32 %s40, 1
          %s183 = scalar_lea.sflag [#allocation3], %s182
          %s184 = sand.u32 %s40, 1
          %s185 = smul.addr %s184, 16
          %s186 = scalar_lea.vmem [#allocation2], %s185
          %s187 = smul.u32 2, %s24
          %s189 = ssub.s32 256, 256
          %190 = vsyncadd %s183, %s189
          %s191 = smul.addr %s23, 2
          %s192 = sadd.s32 %s187, %s191
          %s193 = smul.addr %s192, 128
          %s194 = scalar_lea.hbm %s0, %s193
          %s195 = sshll.u32 %s186, 4
          %s196 = int_to_ptr.vmem [resolvable:$true] %s195
          %201 = dma.hbm_to_vmem [thread:$0]  %s194, 256, %s196, %s183, 128, 128, 8
        $region28: #{tpu_custom_call.1} parent=23 // pred_fallthru
          _
      $region24: #{tpu_custom_call.1} parent=5 // pred_fallthru
        _
      %p202 = scmp.le.s32.totalorder 1, %s16
      %p203 = scmp.lt.s32.totalorder %s16, 3
      %p204 = pnand %p202, %p203
      %p205 = pneg %p204
      // Predicated region
      $region29: #{tpu_custom_call.1} parent=5 // pred_check
        _
      $region30: #{tpu_custom_call.1} parent=5 // pred_check_branch
        %207 = sbr.rel (%p204) target = $region32
      $region31: #{tpu_custom_call.1} parent=5 // pred_region
        %s208 = ssub.s32 %s16, 1
        %s209 = sand.u32 %s43, 1
        %s210 = scalar_lea.sflag [#allocation3], %s209
        %s211 = sand.u32 %s43, 1
        %s212 = smul.addr %s211, 16
        %s213 = scalar_lea.vmem [#allocation2], %s212
        // Predicated region
        $region33: #{tpu_custom_call.1} parent=31 // pred_check
          %p214 = pneg %p56
        $region34: #{tpu_custom_call.1} parent=31 // pred_check_branch
          %216 = sbr.rel (%p214) target = $region36
        $region35: #{tpu_custom_call.1} parent=31 // pred_region
          %217 = dma.done %s210, 256
        $region36: #{tpu_custom_call.1} parent=31 // pred_fallthru
          _
        // Predicated region
        $region37: #{tpu_custom_call.1} parent=31 // pred_check
          %p218 = pneg %p77
        $region38: #{tpu_custom_call.1} parent=31 // pred_check_branch
          %220 = sbr.rel (%p218) target = $region40
        $region39: #{tpu_custom_call.1} parent=31 // pred_region
          %221 = dma.done [#allocation6], 384
        $region40: #{tpu_custom_call.1} parent=31 // pred_fallthru
          _
        // Predicated region
        $region41: #{tpu_custom_call.1} parent=31 // pred_check
          %p222 = pneg %p103
        $region42: #{tpu_custom_call.1} parent=31 // pred_check_branch
          %224 = sbr.rel (%p222) target = $region44
        $region43: #{tpu_custom_call.1} parent=31 // pred_region
          %225 = dma.done [#allocation6], 256
        $region44: #{tpu_custom_call.1} parent=31 // pred_fallthru
          _
        %s226 = sand.u32 %s43, 1
        %s227 = scalar_lea.sflag [#allocation3], %s226
        %s228 = sand.u32 %s43, 1
        %s229 = smul.addr %s228, 16
        %s230 = scalar_lea.vmem [#allocation2], %s229
        %p231 = pneg %p56
        %p232 = pneg %p53
        %p233 = pneg %p77
        %p234 = pneg %p74
        %p235 = pneg %p103
        %p236 = pneg %p100
        %p237 = pneg %p131
        %p238 = pneg %p128
        %s239 = sand.u32 %s118, 1
        %s240 = scalar_lea.sflag [#allocation4], %s239
        %s241 = sand.u32 %s118, 1
        %s242 = smul.addr %s241, 16
        %s243 = scalar_lea.vmem [#allocation8], %s242
        %s244 = smul.u32 2, %s26
        %s245 = smul.u32 2, %s26
        %s246 = smul.u32 2, %s26
        %v248 = vld [vmem:[%s213] sm:$0xff]
        %v249 = vld [vmem:[%s213 + $0x8] sm:$0xff]
        %v250 = vpack.c.bf16 %v249, %v248
        %v251 = vld [vmem:[#allocation5] sm:$0xf]
        %v252 = vld [vmem:[#allocation5 + $0x4] sm:$0xf]
        %v253 = vld [vmem:[#allocation5 + $0x8] sm:$0xf]
        %v254 = vld [vmem:[#allocation5 + $0xc] sm:$0xf]
        %v255 = vld [vmem:[#allocation5 + $0x10] sm:$0xf]
        %v256 = vld [vmem:[#allocation5 + $0x14] sm:$0xf]
        %v257 = vld [vmem:[#allocation7] sm:$0xff]
        %v258 = vld [vmem:[#allocation7 + $0x8] sm:$0xff]
        %v265 = vunpack.c.l.b16 %v251
        %v266 = vunpack.c.l.b16 %v252
        %v267 = vunpack.c.l.b16 %v253
        %v268 = vunpack.c.l.b16 %v254
        %v269 = vunpack.c.l.b16 %v255
        %v270 = vunpack.c.l.b16 %v256
        %v271 = vpack.c.b16 %v266, %v265
        %v272 = vpack.c.b16 %v268, %v267
        %v273 = vpack.c.b16 %v270, %v269
        %vm277 = vcmask 392192
        %v279 = vsel %vm277, %v250, 0
        %281 = vmatprep.subr.bf16.mxu0 0
        %282 = vmatpush1.bf16.msra.mxu0 %v271
        %283 = vmatprep.subr.bf16.mxu0 0
        %284 = vmatpush1.bf16.msra.mxu0 %v272
        %285 = vmatprep.subr.bf16.mxu0 0
        %286 = vmatpush1.bf16.msra.mxu0 %v273
        %287 = vmatprep.subr.bf16.mxu0 0
        %288 = vmatpush1.bf16.msra.mxu0 0
        %289 = vmatprep.subr.bf16.mxu0 0
        %290 = vmatpush1.bf16.msra.mxu0 0
        %291 = vmatprep.subr.bf16.mxu0 0
        %292 = vmatpush1.bf16.msra.mxu0 0
        %293 = vmatprep.subr.bf16.mxu0 0
        %294 = vmatpush1.bf16.msra.mxu0 0
        %295 = vmatprep.subr.bf16.mxu0 0
        %296 = vmatpush1.bf16.msra.mxu0 0
        %297 = vmatprep.subr.bf16.mxu0 0
        %298 = vmatpush1.bf16.msra.mxu0 0
        %299 = vmatprep.subr.bf16.mxu0 0
        %300 = vmatpush1.bf16.msra.mxu0 0
        %301 = vmatprep.subr.bf16.mxu0 0
        %302 = vmatpush1.bf16.msra.mxu0 0
        %303 = vmatprep.subr.bf16.mxu0 0
        %304 = vmatpush1.bf16.msra.mxu0 0
        %305 = vmatprep.subr.bf16.mxu0 0
        %306 = vmatpush1.bf16.msra.mxu0 0
        %307 = vmatprep.subr.bf16.mxu0 0
        %308 = vmatpush1.bf16.msra.mxu0 0
        %309 = vmatprep.subr.bf16.mxu0 0
        %310 = vmatpush1.bf16.msra.mxu0 0
        %311 = vmatprep.subr.bf16.mxu0 0
        %312 = vmatpush1.bf16.msra.mxu0 0
        %313 = vmatprep.mubr.bf16.mxu0 0
        %314 = vmatmul.mubr.bf16.gmra.mrb[0].mxu0 %v279
        %v315 = vpop.f32.mrb[0].mxu0
        %v316 = vadd.f32 %v257, %v315
        %v317 = vpop.f32.mrb[0].mxu0
        %v318 = vpop.f32.mrb[0].mxu0
        %v319 = vadd.f32 %v258, %v318
        %v320 = vpop.f32.mrb[0].mxu0
        %321 = vdwg.mxu0
        %322 = vst [vmem:[%s243] sm:$0xff] %v316
        %323 = vst [vmem:[%s243 + $0x8] sm:$0xff] %v319
        %s324 = sand.u32 %s118, 1
        %s325 = scalar_lea.sflag [#allocation4], %s324
        %s326 = sand.u32 %s118, 1
        %s327 = smul.addr %s326, 16
        %s328 = scalar_lea.vmem [#allocation8], %s327
        // Predicated region
        $region45: #{tpu_custom_call.1} parent=31 // pred_check
          %p329 = pneg %p128
        $region46: #{tpu_custom_call.1} parent=31 // pred_check_branch
          %331 = sbr.rel (%p329) target = $region48
        $region47: #{tpu_custom_call.1} parent=31 // pred_region
          %s332 = smul.u32 2, %s26
          %s334 = ssub.s32 256, 256
          %335 = vsyncadd %s325, %s334
          %s336 = smul.addr %s25, 2
          %s337 = sadd.s32 %s332, %s336
          %s338 = smul.addr %s337, 128
          %s339 = scalar_lea.hbm %s3, %s338
          %s340 = sshll.u32 %s328, 4
          %s341 = int_to_ptr.vmem [resolvable:$true] %s340
          %346 = dma.vmem_to_hbm [thread:$0]  %s341, 256, %s339, %s325, 128, 128, 8
        $region48: #{tpu_custom_call.1} parent=31 // pred_fallthru
          _
      $region32: #{tpu_custom_call.1} parent=5 // pred_fallthru
        _
      %p347 = scmp.le.s32.totalorder 2, %s16
      // Predicated region
      $region49: #{tpu_custom_call.1} parent=5 // pred_check
        %p348 = pneg %p347
      $region50: #{tpu_custom_call.1} parent=5 // pred_check_branch
        %350 = sbr.rel (%p348) target = $region52
      $region51: #{tpu_custom_call.1} parent=5 // pred_region
        %s351 = ssub.s32 %s16, 2
        // Predicated region
        $region53: #{tpu_custom_call.1} parent=51 // pred_check
          %p352 = pneg %p134
        $region54: #{tpu_custom_call.1} parent=51 // pred_check_branch
          %354 = sbr.rel (%p352) target = $region56
        $region55: #{tpu_custom_call.1} parent=51 // pred_region
          %s355 = sand.u32 %s119, 1
          %s356 = scalar_lea.sflag [#allocation4], %s355
          %s357 = sand.u32 %s119, 1
          %s358 = smul.addr %s357, 16
          %s359 = scalar_lea.vmem [#allocation8], %s358
          %360 = dma.done %s356, 256
        $region56: #{tpu_custom_call.1} parent=51 // pred_fallthru
          _
      $region52: #{tpu_custom_call.1} parent=5 // pred_fallthru
        _
    $region6: #{tpu_custom_call.1} parent=1 // loop_footer
      %s20 = sadd.s32 1, %s16
    $region7: #{tpu_custom_call.1} parent=1 // loop_footer_branch
      %15 = sbr.rel target = $region3
    $region8: #{tpu_custom_call.1} parent=1 // loop_exit
      _
    %361 = vsyncpa [#allocation3], 1
    %s362 = scalar_lea.sflag [#allocation3], 1
    %363 = vsyncpa %s362, 1
    %364 = vsyncpa [#allocation6], 1
    %365 = vsyncpa [#allocation4], 1
    %s366 = scalar_lea.sflag [#allocation4], 1
    %367 = vsyncpa %s366, 1

</llo_original>
